<compile_context>
chip_gen: v6e
topology: v6e:2x2x1
jax: 0.10.0
libtpu: 0.0.40
codegen_flags: <defaults>
</compile_context>

<pallas_src>
import functools

import jax
import jax.numpy as jnp
from jax.experimental import pallas as pl
from jax.experimental.pallas import tpu as pltpu


def _round_up(n, m):
    return ((n + m - 1) // m) * m


# -----------------------------------------------------------------------------
# Kernel body (one graph per grid step)
# -----------------------------------------------------------------------------
def _graph_decoder_kernel(x_ref, A_ref, w1t_ref, b1_ref, wp_ref, w2t_ref, beff_ref,
                          out_ref, apred_ref, *, n_rows):
    f32 = jnp.float32

    # h = relu(fc1(x)) = relu(x @ W1^T + b1)                    [in_nodes, hidden]
    # b1_ref is [1, hidden]; the add broadcasts over sublanes in the VPU.
    h = jnp.dot(x_ref[...], w1t_ref[...], preferred_element_type=f32) + b1_ref[...]
    h = jnp.maximum(h, 0.0)

    # Pooling, re-associated: Wp_pad @ (A @ h)                  [N_LANE, hidden]
    ah = jnp.dot(A_ref[...], h, preferred_element_type=f32)      # [in_nodes, hidden]
    ph = jnp.dot(wp_ref[...], ah, preferred_element_type=f32)    # [N_LANE, hidden]

    # out_f (lane-padded): ph @ W2^T_pad + b_eff                [N_LANE, F_PAD]
    # Padded rows/cols are exact zeros (zero weights / zero bias) by construction.
    out_f = jnp.dot(ph, w2t_ref[...], preferred_element_type=f32) + beff_ref[...]

    # Real (sublane-aligned) output rows.
    out_rows = out_f[:n_rows, :]                                 # [N_ROWS, F_PAD]

    # A_pred logits = out_rows @ out_f^T via trailing-dim contraction
    # (no materialized transpose).  Padded rows of out_f are zero, so padded
    # lanes become sigmoid(0)=0.5 and are sliced away in the wrapper.
    logits = jax.lax.dot_general(out_rows, out_f,
                                 (((1,), (1,)), ((), ())),
                                 preferred_element_type=f32)     # [N_ROWS, N_LANE]
    a_pred = jax.nn.sigmoid(logits)
    # nan_to_num(nan=0.5, posinf=1.0, neginf=0.0): sigmoid is in [0,1] or NaN,
    # so only the NaN branch is reachable; the final clip(A_pred, 0, 1) is a no-op.
    a_pred = jnp.where(jnp.isnan(a_pred), 0.5, a_pred)

    out_ref[...] = jnp.clip(out_rows, -1.0, 1.0)
    apred_ref[...] = a_pred


# -----------------------------------------------------------------------------
# One-time parameter preparation (cache the result; do NOT call per forward)
# -----------------------------------------------------------------------------
def prepare_decoder_params(params):
    """Fold biases, transpose and zero-pad weights to lane/sublane-friendly slabs.

    params: dict with w1,b1,w2,b2,wp,bp in PyTorch nn.Linear layout.
    Returns a dict of arrays; compute once per parameter set and reuse.
    """
    f32 = jnp.float32
    hidden_features, in_features = params["w1"].shape
    out_features = params["w2"].shape[0]
    out_nodes, in_nodes = params["wp"].shape

    LANE = 128
    n_lane = _round_up(out_nodes, LANE)     # lane dim of the A_pred slab
    f_pad = _round_up(out_features, LANE)   # lane dim of the out_f slab

    w1t = params["w1"].T.astype(f32)                              # [in_features, hidden]
    b1 = params["b1"].astype(f32)[None, :]                        # [1, hidden]
    w2t = params["w2"].T.astype(f32)                              # [hidden, out_features]

    # Bias folding:
    #   Wp (A h W2^T + 1 b2^T) + bp 1^T = Wp (A h) W2^T + rowsum(Wp) b2^T + bp 1^T
    b_eff = (params["wp"].astype(f32).sum(axis=1, keepdims=True)
             * params["b2"].astype(f32)[None, :]
             + params["bp"].astype(f32)[:, None])                 # [out_nodes, out_features]

    wp_p = jnp.zeros((n_lane, in_nodes), f32).at[:out_nodes, :].set(params["wp"].astype(f32))
    w2t_p = jnp.zeros((hidden_features, f_pad), f32).at[:, :out_features].set(w2t)
    beff_p = jnp.zeros((n_lane, f_pad), f32).at[:out_nodes, :out_features].set(b_eff)

    return {"w1t": w1t, "b1": b1, "wp_p": wp_p, "w2t_p": w2t_p, "beff_p": beff_p}


# -----------------------------------------------------------------------------
# Jitted forward: batched over graphs with grid=(B,)
# -----------------------------------------------------------------------------
@functools.partial(jax.jit, static_argnames=("out_nodes", "out_features"))
def graph_decoder_batched(x, A, prepped, *, out_nodes, out_features):
    """x: [B, in_nodes, in_features], A: [B, in_nodes, in_nodes]."""
    f32 = jnp.float32
    B, in_nodes, in_features = x.shape
    hidden = prepped["w1t"].shape[1]
    n_lane = prepped["wp_p"].shape[0]       # round_up(out_nodes, 128)
    f_pad = prepped["w2t_p"].shape[1]       # round_up(out_features, 128)
    n_rows = _round_up(out_nodes, 8)        # sublane-aligned row count

    def batched(shape):
        # Per-graph block, leading batch dim squeezed out of the kernel ref.
        return pl.BlockSpec((None,) + tuple(shape),
                            lambda b, _n=len(shape): (b,) + (0,) * _n)

    def shared(shape):
        # Constant block index -> stays resident in VMEM across the grid.
        return pl.BlockSpec(tuple(shape),
                            lambda b, _n=len(shape): (0,) * _n)

    in_specs = [
        batched((in_nodes, in_features)),        # x
        batched((in_nodes, in_nodes)),           # A
        shared((in_features, hidden)),           # w1t
        shared((1, hidden)),                     # b1 (row; broadcasts in-kernel)
        shared((n_lane, in_nodes)),              # wp_p
        shared((hidden, f_pad)),                 # w2t_p
        shared((n_lane, f_pad)),                 # beff_p
    ]
    out_specs = (
        batched((n_rows, f_pad)),                # out_f slab
        batched((n_rows, n_lane)),               # A_pred slab
    )
    out_shapes = (
        jax.ShapeDtypeStruct((B, n_rows, f_pad), f32),
        jax.ShapeDtypeStruct((B, n_rows, n_lane), f32),
    )

    kernel = functools.partial(_graph_decoder_kernel, n_rows=n_rows)

    # TODO(synk): for large graphs, also grid over row-blocks of A / wp_p and
    # re-derive tile sizes per generation (64 MiB VMEM on v7x vs 128 MiB on
    # v5e/v6e), raising vmem_limit_bytes explicitly and keeping the k-reduction
    # as the last, "arbitrary" grid axis.
    out_slab, apred_slab = pl.pallas_call(
        kernel,
        out_shape=out_shapes,
        grid=(B,),
        in_specs=in_specs,
        out_specs=out_specs,
        compiler_params=pltpu.CompilerParams(dimension_semantics=("parallel",)),
    )(x.astype(f32), A.astype(f32), prepped["w1t"], prepped["b1"],
      prepped["wp_p"], prepped["w2t_p"], prepped["beff_p"])

    return (out_slab[:, :out_nodes, :out_features],
            apred_slab[:, :out_nodes, :out_nodes])


def graph_decoder(x, A, prepped, *, out_nodes, out_features):
    """Single-graph convenience wrapper. x: [in_nodes, in_features], A: [in_nodes, in_nodes]."""
    out_f, A_pred = graph_decoder_batched(x[None], A[None], prepped,
                                          out_nodes=out_nodes, out_features=out_features)
    return out_f[0], A_pred[0]


# -----------------------------------------------------------------------------
# Test helpers
# -----------------------------------------------------------------------------
def _init_params(key, in_nodes, out_nodes, in_features, hidden_features, out_features):
    """Deterministic PyTorch-Linear-style init: U(-1/sqrt(fan_in), 1/sqrt(fan_in))."""
    ks = jax.random.split(key, 6)

    def unif(k, shape, fan_in):
        bound = 1.0 / jnp.sqrt(fan_in)
        return jax.random.uniform(k, shape, jnp.float32, -bound, bound)

    return {
        "w1": unif(ks[0], (hidden_features, in_features), in_features),
        "b1": unif(ks[1], (hidden_features,), in_features),
        "w2": unif(ks[2], (out_features, hidden_features), hidden_features),
        "b2": unif(ks[3], (out_features,), hidden_features),
        "wp": unif(ks[4], (out_nodes, in_nodes), in_nodes),
        "bp": unif(ks[5], (out_nodes,), in_nodes),
    }


def _reference(x, A, p):
    # Pure-JAX reference of the PyTorch forward.
    h = jax.nn.relu(x @ p["w1"].T + p["b1"])
    h_agg = A @ h
    h_trans = h_agg @ p["w2"].T + p["b2"]
    h_pooled_T = h_trans.T @ p["wp"].T + p["bp"]
    out_f = h_pooled_T.T
    A_pred = jax.nn.sigmoid(out_f @ out_f.T)
    A_pred = jnp.nan_to_num(A_pred, nan=0.5, posinf=1.0, neginf=0.0)
    out_f = jnp.clip(out_f, -1.0, 1.0)
    A_pred = jnp.clip(A_pred, 0.0, 1.0)
    return out_f, A_pred


if __name__ == "__main__":
    in_nodes, hidden_nodes, out_nodes = 16, 12, 8   # hidden_nodes unused by forward (matches PyTorch)
    in_features, hidden_features, out_features = 32, 16, 8

    key = jax.random.PRNGKey(0)
    kx, ka, kp, kbx, kba = jax.random.split(key, 5)

    x = jax.random.normal(kx, (in_nodes, in_features), jnp.float32)
    A = jax.random.uniform(ka, (in_nodes, in_nodes), jnp.float32)
    params = _init_params(kp, in_nodes, out_nodes, in_features, hidden_features, out_features)

    # One-time parameter prep (cached; not on the per-call path).
    prepped = prepare_decoder_params(params)
    jax.block_until_ready(prepped)

    # Single graph.
    out_f, A_pred = graph_decoder(x, A, prepped, out_nodes=out_nodes, out_features=out_features)
    jax.block_until_ready((out_f, A_pred))

    ref_out, ref_A = _reference(x, A, params)
    assert out_f.shape == (out_nodes, out_features)
    assert A_pred.shape == (out_nodes, out_nodes)
    assert jnp.allclose(out_f, ref_out, atol=1e-5, rtol=1e-5)
    assert jnp.allclose(A_pred, ref_A, atol=1e-5, rtol=1e-5)

    # Batched graphs (grid=(B,), parallel across TensorCores on v7x).
    B = 2
    xb = jax.random.normal(kbx, (B, in_nodes, in_features), jnp.float32)
    Ab = jax.random.uniform(kba, (B, in_nodes, in_nodes), jnp.float32)
    out_b, A_b = graph_decoder_batched(xb, Ab, prepped,
                                       out_nodes=out_nodes, out_features=out_features)
    jax.block_until_ready((out_b, A_b))
    assert out_b.shape == (B, out_nodes, out_features)
    assert A_b.shape == (B, out_nodes, out_nodes)
    for i in range(B):
        r_out, r_A = _reference(xb[i], Ab[i], params)
        assert jnp.allclose(out_b[i], r_out, atol=1e-5, rtol=1e-5)
        assert jnp.allclose(A_b[i], r_A, atol=1e-5, rtol=1e-5)

    print("KERNEL_OK")
</pallas_src>

<mosaic_0001>
module attributes {stable_mosaic.version = 11 : i64} {
  func.func @_graph_decoder_kernel(%arg0: i32, %arg1: memref<1x16x32xf32, #tpu.memory_space<vmem>>, %arg2: memref<1x16x16xf32, #tpu.memory_space<vmem>>, %arg3: memref<32x16xf32, #tpu.memory_space<vmem>>, %arg4: memref<1x16xf32, #tpu.memory_space<vmem>>, %arg5: memref<128x16xf32, #tpu.memory_space<vmem>>, %arg6: memref<16x128xf32, #tpu.memory_space<vmem>>, %arg7: memref<128x128xf32, #tpu.memory_space<vmem>>, %arg8: memref<1x8x128xf32, #tpu.memory_space<vmem>>, %arg9: memref<1x8x128xf32, #tpu.memory_space<vmem>>) attributes {dimension_semantics = [#tpu.dimension_semantics<parallel>], iteration_bounds = array<i64: 1>, scalar_prefetch = 0 : i64, scratch_operands = 0 : i64, tpu.core_type = #tpu.core_type<tc>, window_params = [{transform_indices = @transform_0, window_bounds = array<i64: 1, 16, 32>}, {transform_indices = @transform_1, window_bounds = array<i64: 1, 16, 16>}, {pipeline_mode = #tpu.pipeline_mode<synchronous>, transform_indices = @transform_2, window_bounds = array<i64: 32, 16>}, {pipeline_mode = #tpu.pipeline_mode<synchronous>, transform_indices = @transform_3, window_bounds = array<i64: 1, 16>}, {pipeline_mode = #tpu.pipeline_mode<synchronous>, transform_indices = @transform_4, window_bounds = array<i64: 128, 16>}, {pipeline_mode = #tpu.pipeline_mode<synchronous>, transform_indices = @transform_5, window_bounds = array<i64: 16, 128>}, {pipeline_mode = #tpu.pipeline_mode<synchronous>, transform_indices = @transform_6, window_bounds = array<i64: 128, 128>}, {transform_indices = @transform_7, window_bounds = array<i64: 1, 8, 128>}, {transform_indices = @transform_8, window_bounds = array<i64: 1, 8, 128>}]} {
    %c0 = arith.constant 0 : index
    %c0_0 = arith.constant 0 : index
    %c0_1 = arith.constant 0 : index
    %0 = vector.load %arg1[%c0, %c0_0, %c0_1] : memref<1x16x32xf32, #tpu.memory_space<vmem>>, vector<1x16x32xf32>
    %1 = vector.shape_cast %0 : vector<1x16x32xf32> to vector<16x32xf32>
    %c0_2 = arith.constant 0 : index
    %c0_3 = arith.constant 0 : index
    %2 = vector.load %arg3[%c0_2, %c0_3] : memref<32x16xf32, #tpu.memory_space<vmem>>, vector<32x16xf32>
    %cst = arith.constant dense<0.000000e+00> : vector<16x16xf32>
    %3 = tpu.matmul %1, %2, %cst {dimension_numbers = #tpu.dot_dimension_numbers<[1], [0], [0], [1], [0, 0, 1, 1], [], []>} : vector<16x32xf32>, vector<32x16xf32>, vector<16x16xf32> -> vector<16x16xf32>
    %c0_4 = arith.constant 0 : index
    %c0_5 = arith.constant 0 : index
    %4 = vector.load %arg4[%c0_4, %c0_5] : memref<1x16xf32, #tpu.memory_space<vmem>>, vector<1x16xf32>
    %5 = vector.broadcast %4 : vector<1x16xf32> to vector<16x16xf32>
    %6 = arith.addf %3, %5 : vector<16x16xf32>
    %cst_6 = arith.constant 0.000000e+00 : f32
    %7 = vector.broadcast %cst_6 : f32 to vector<16x16xf32>
    %8 = arith.maximumf %6, %7 : vector<16x16xf32>
    %c0_7 = arith.constant 0 : index
    %c0_8 = arith.constant 0 : index
    %c0_9 = arith.constant 0 : index
    %9 = vector.load %arg2[%c0_7, %c0_8, %c0_9] : memref<1x16x16xf32, #tpu.memory_space<vmem>>, vector<1x16x16xf32>
    %10 = vector.shape_cast %9 : vector<1x16x16xf32> to vector<16x16xf32>
    %cst_10 = arith.constant dense<0.000000e+00> : vector<16x16xf32>
    %11 = tpu.matmul %10, %8, %cst_10 {dimension_numbers = #tpu.dot_dimension_numbers<[1], [0], [0], [1], [0, 0, 1, 1], [], []>} : vector<16x16xf32>, vector<16x16xf32>, vector<16x16xf32> -> vector<16x16xf32>
    %c0_11 = arith.constant 0 : index
    %c0_12 = arith.constant 0 : index
    %12 = vector.load %arg5[%c0_11, %c0_12] : memref<128x16xf32, #tpu.memory_space<vmem>>, vector<128x16xf32>
    %cst_13 = arith.constant dense<0.000000e+00> : vector<128x16xf32>
    %13 = tpu.matmul %12, %11, %cst_13 {dimension_numbers = #tpu.dot_dimension_numbers<[1], [0], [0], [1], [0, 0, 1, 1], [], []>} : vector<128x16xf32>, vector<16x16xf32>, vector<128x16xf32> -> vector<128x16xf32>
    %c0_14 = arith.constant 0 : index
    %c0_15 = arith.constant 0 : index
    %14 = vector.load %arg6[%c0_14, %c0_15] : memref<16x128xf32, #tpu.memory_space<vmem>>, vector<16x128xf32>
    %cst_16 = arith.constant dense<0.000000e+00> : vector<128x128xf32>
    %15 = tpu.matmul %13, %14, %cst_16 {dimension_numbers = #tpu.dot_dimension_numbers<[1], [0], [0], [1], [0, 0, 1, 1], [], []>} : vector<128x16xf32>, vector<16x128xf32>, vector<128x128xf32> -> vector<128x128xf32>
    %c0_17 = arith.constant 0 : index
    %c0_18 = arith.constant 0 : index
    %16 = vector.load %arg7[%c0_17, %c0_18] : memref<128x128xf32, #tpu.memory_space<vmem>>, vector<128x128xf32>
    %17 = arith.addf %15, %16 : vector<128x128xf32>
    %18 = vector.extract_strided_slice %17 {offsets = [0, 0], sizes = [8, 128], strides = [1, 1]} : vector<128x128xf32> to vector<8x128xf32>
    %cst_19 = arith.constant dense<0.000000e+00> : vector<8x128xf32>
    %19 = tpu.matmul %18, %17, %cst_19 {dimension_numbers = #tpu.dot_dimension_numbers<[1], [1], [0], [0], [0, 0, 1, 0], [], []>} : vector<8x128xf32>, vector<128x128xf32>, vector<8x128xf32> -> vector<8x128xf32>
    %20 = arith.negf %19 : vector<8x128xf32>
    %21 = math.exp %20 : vector<8x128xf32>
    %cst_20 = arith.constant 1.000000e+00 : f32
    %22 = vector.broadcast %cst_20 : f32 to vector<8x128xf32>
    %23 = arith.addf %22, %21 : vector<8x128xf32>
    %24 = arith.divf %22, %23 : vector<8x128xf32>
    %25 = arith.cmpf one, %24, %24 : vector<8x128xf32>
    %cst_21 = arith.constant 5.000000e-01 : f32
    %26 = vector.broadcast %cst_21 : f32 to vector<8x128xf32>
    %27 = arith.select %25, %26, %24 : vector<8x128xi1>, vector<8x128xf32>
    %cst_22 = arith.constant -1.000000e+00 : f32
    %cst_23 = arith.constant 1.000000e+00 : f32
    %28 = vector.broadcast %cst_22 : f32 to vector<8x128xf32>
    %29 = arith.maximumf %28, %18 : vector<8x128xf32>
    %30 = vector.broadcast %cst_23 : f32 to vector<8x128xf32>
    %31 = arith.minimumf %30, %29 : vector<8x128xf32>
    %c0_24 = arith.constant 0 : index
    %c0_25 = arith.constant 0 : index
    %c0_26 = arith.constant 0 : index
    %32 = vector.load %arg8[%c0_24, %c0_25, %c0_26] : memref<1x8x128xf32, #tpu.memory_space<vmem>>, vector<1x8x128xf32>
    %33 = vector.shape_cast %32 : vector<1x8x128xf32> to vector<8x128xf32>
    %34 = vector.shape_cast %31 : vector<8x128xf32> to vector<1x8x128xf32>
    tpu.vector_store %arg8[%c0_24, %c0_25, %c0_26], %34 {strides = array<i32>} : memref<1x8x128xf32, #tpu.memory_space<vmem>>, vector<1x8x128xf32>,
    %c0_27 = arith.constant 0 : index
    %c0_28 = arith.constant 0 : index
    %c0_29 = arith.constant 0 : index
    %35 = vector.load %arg9[%c0_27, %c0_28, %c0_29] : memref<1x8x128xf32, #tpu.memory_space<vmem>>, vector<1x8x128xf32>
    %36 = vector.shape_cast %35 : vector<1x8x128xf32> to vector<8x128xf32>
    %37 = vector.shape_cast %27 : vector<8x128xf32> to vector<1x8x128xf32>
    tpu.vector_store %arg9[%c0_27, %c0_28, %c0_29], %37 {strides = array<i32>} : memref<1x8x128xf32, #tpu.memory_space<vmem>>, vector<1x8x128xf32>,
    return
  }
  func.func @transform_0(%arg0: i32) -> (i32, i32, i32) {
    %c0_i32 = arith.constant 0 : i32
    %c0_i32_0 = arith.constant 0 : i32
    %c0_i32_1 = arith.constant 0 : i32
    return %arg0, %c0_i32, %c0_i32_0 : i32, i32, i32
  }
  func.func @transform_1(%arg0: i32) -> (i32, i32, i32) {
    %c0_i32 = arith.constant 0 : i32
    %c0_i32_0 = arith.constant 0 : i32
    %c0_i32_1 = arith.constant 0 : i32
    return %arg0, %c0_i32, %c0_i32_0 : i32, i32, i32
  }
  func.func @transform_2(%arg0: i32) -> (i32, i32) {
    %c0_i32 = arith.constant 0 : i32
    %c0_i32_0 = arith.constant 0 : i32
    %c0_i32_1 = arith.constant 0 : i32
    return %c0_i32, %c0_i32_0 : i32, i32
  }
  func.func @transform_3(%arg0: i32) -> (i32, i32) {
    %c0_i32 = arith.constant 0 : i32
    %c0_i32_0 = arith.constant 0 : i32
    %c0_i32_1 = arith.constant 0 : i32
    return %c0_i32, %c0_i32_0 : i32, i32
  }
  func.func @transform_4(%arg0: i32) -> (i32, i32) {
    %c0_i32 = arith.constant 0 : i32
    %c0_i32_0 = arith.constant 0 : i32
    %c0_i32_1 = arith.constant 0 : i32
    return %c0_i32, %c0_i32_0 : i32, i32
  }
  func.func @transform_5(%arg0: i32) -> (i32, i32) {
    %c0_i32 = arith.constant 0 : i32
    %c0_i32_0 = arith.constant 0 : i32
    %c0_i32_1 = arith.constant 0 : i32
    return %c0_i32, %c0_i32_0 : i32, i32
  }
  func.func @transform_6(%arg0: i32) -> (i32, i32) {
    %c0_i32 = arith.constant 0 : i32
    %c0_i32_0 = arith.constant 0 : i32
    %c0_i32_1 = arith.constant 0 : i32
    return %c0_i32, %c0_i32_0 : i32, i32
  }
  func.func @transform_7(%arg0: i32) -> (i32, i32, i32) {
    %c0_i32 = arith.constant 0 : i32
    %c0_i32_0 = arith.constant 0 : i32
    %c0_i32_1 = arith.constant 0 : i32
    return %arg0, %c0_i32, %c0_i32_0 : i32, i32, i32
  }
  func.func @transform_8(%arg0: i32) -> (i32, i32, i32) {
    %c0_i32 = arith.constant 0 : i32
    %c0_i32_0 = arith.constant 0 : i32
    %c0_i32_1 = arith.constant 0 : i32
    return %arg0, %c0_i32, %c0_i32_0 : i32, i32, i32
  }
}

</mosaic_0001>

<llo_original>
// kernel: graph_decoder_batched.1
$region0: #{graph_decoder_batched.1}
  #allocation0 [shape = 'u32[]', space=smem, size = 0x4, offset = 0x4, fixed_abs, tag = 'smem constant byte address 0x4 - core index']
  #allocation1 [shape = 'u32[144,128]{1,0:T(1,128)}', space=vmem, size = 0x12000, scoped, tag = 'internal scratch']
  %s0 = inlined_call_operand.vmem [shape: f32[1,16,32], index: 0, kind: input, shape index: {}]
  %s1 = inlined_call_operand.vmem [shape: f32[1,16,16], index: 1, kind: input, shape index: {}]
  %s2 = inlined_call_operand.vmem [shape: f32[32,16], index: 2, kind: input, shape index: {}]
  %s3 = inlined_call_operand.vmem [shape: f32[1,16], index: 3, kind: input, shape index: {}]
  %s4 = inlined_call_operand.vmem [shape: f32[128,16], index: 4, kind: input, shape index: {}]
  %s5 = inlined_call_operand.vmem [shape: f32[16,128], index: 5, kind: input, shape index: {}]
  %s6 = inlined_call_operand.vmem [shape: f32[128,128], index: 6, kind: input, shape index: {}]
  %s7 = inlined_call_operand.hbm [shape: f32[1,8,128], index: 7, kind: output, shape index: {0}]
  %s8 = inlined_call_operand.hbm [shape: f32[1,8,128], index: 8, kind: output, shape index: {1}]
  %9 = xla_tuple %s7, %s8
  %s10 = sld [smem:[#allocation0]]
  $region46: #{graph_decoder_batched.1} parent=0
    _
  %s12 = ssub.s32 1, %s10
  %s13 = scalar_select 0, %s12, %s10
  $region1: #{graph_decoder_batched.1} parent=0
    #allocation2 [shape = 'u8[4096]{0}', space=vmem, size = 0x1000, scoped, tag = 'output window, operand 0, single buffered']
    #allocation3 [shape = 's32[1]{0}', space=sflag, size = 0x4, scoped, tag = 'scoped memory for graph_decoder_batched.1']
    #allocation4 [shape = 'u8[4096]{0}', space=vmem, size = 0x1000, scoped, tag = 'output window, operand 1, single buffered']
    #allocation5 [shape = 's32[1]{0}', space=sflag, size = 0x4, scoped, tag = 'scoped memory for graph_decoder_batched.1']
    %14 = vsyncpa [#allocation3], 0
    %15 = vsyncpa [#allocation5], 0
    // Predicated region
    $region2: #{graph_decoder_batched.1} parent=1 // pred_check
      _
    $region3: #{graph_decoder_batched.1} parent=1 // pred_check_branch
      %17 = sbr.rel (0) target = $region5
    $region4: #{graph_decoder_batched.1} parent=1 // pred_region
      _
    $region5: #{graph_decoder_batched.1} parent=1 // pred_fallthru
      _
    // Predicated region
    $region6: #{graph_decoder_batched.1} parent=1 // pred_check
      _
    $region7: #{graph_decoder_batched.1} parent=1 // pred_check_branch
      %19 = sbr.rel (0) target = $region9
    $region8: #{graph_decoder_batched.1} parent=1 // pred_region
      _
    $region9: #{graph_decoder_batched.1} parent=1 // pred_fallthru
      _
    // Predicated region
    $region10: #{graph_decoder_batched.1} parent=1 // pred_check
      _
    $region11: #{graph_decoder_batched.1} parent=1 // pred_check_branch
      %21 = sbr.rel (0) target = $region13
    $region12: #{graph_decoder_batched.1} parent=1 // pred_region
      _
    $region13: #{graph_decoder_batched.1} parent=1 // pred_fallthru
      _
    // Predicated region
    $region14: #{graph_decoder_batched.1} parent=1 // pred_check
      _
    $region15: #{graph_decoder_batched.1} parent=1 // pred_check_branch
      %23 = sbr.rel (0) target = $region17
    $region16: #{graph_decoder_batched.1} parent=1 // pred_region
      _
    $region17: #{graph_decoder_batched.1} parent=1 // pred_fallthru
      _
    // Predicated region
    $region18: #{graph_decoder_batched.1} parent=1 // pred_check
      _
    $region19: #{graph_decoder_batched.1} parent=1 // pred_check_branch
      %25 = sbr.rel (0) target = $region21
    $region20: #{graph_decoder_batched.1} parent=1 // pred_region
      _
    $region21: #{graph_decoder_batched.1} parent=1 // pred_fallthru
      _
    // Predicated region
    $region22: #{graph_decoder_batched.1} parent=1 // pred_check
      _
    $region23: #{graph_decoder_batched.1} parent=1 // pred_check_branch
      %27 = sbr.rel (0) target = $region25
    $region24: #{graph_decoder_batched.1} parent=1 // pred_region
      _
    $region25: #{graph_decoder_batched.1} parent=1 // pred_fallthru
      _
    // Predicated region
    $region26: #{graph_decoder_batched.1} parent=1 // pred_check
      _
    $region27: #{graph_decoder_batched.1} parent=1 // pred_check_branch
      %29 = sbr.rel (0) target = $region29
    $region28: #{graph_decoder_batched.1} parent=1 // pred_region
      _
    $region29: #{graph_decoder_batched.1} parent=1 // pred_fallthru
      _
    %v30 = vld [vmem:[%s0] sm:$0xff]
    %v31 = vld [vmem:[%s0 + $0x8] sm:$0xff]
    %v32 = vld [vmem:[%s2] sm:$0xff]
    %v33 = vld [vmem:[%s2 + $0x8] sm:$0xff]
    %v34 = vld [vmem:[%s2 + $0x10] sm:$0xff]
    %v35 = vld [vmem:[%s2 + $0x18] sm:$0xff]
    %v36 = vld [vmem:[%s3] sm:$0x1]
    %v38 = vlaneseq
    %v39 = vshrl.u32 %v38, 7
    %v40 = vsub.s32 0, %v39
    %v41 = vrot.slane %v36, %v40
    %vm43 = vcmask 261120
    %v45 = vsel %vm43, %v30, 0
    %v48 = vsel %vm43, %v31, 0
    %50 = vmatprep.subr.mxu0 0.0
    %51 = vmatpush1.msra.mxu0 0.0
    %52 = vmatprep.subr.mxu0 0.0
    %53 = vmatpush1.msra.mxu0 0.0
    %54 = vmatprep.subr.mxu0 0.0
    %55 = vmatpush1.msra.mxu0 0.0
    %56 = vmatprep.subr.mxu0 0.0
    %57 = vmatpush1.msra.mxu0 0.0
    %58 = vmatprep.subr.mxu0 0.0
    %59 = vmatpush1.msra.mxu0 0.0
    %60 = vmatprep.subr.mxu0 0.0
    %61 = vmatpush1.msra.mxu0 0.0
    %62 = vmatprep.subr.mxu0 0.0
    %63 = vmatpush1.msra.mxu0 0.0
    %64 = vmatprep.subr.mxu0 0.0
    %65 = vmatpush1.msra.mxu0 0.0
    %66 = vmatprep.subr.mxu0 0.0
    %67 = vmatpush1.msra.mxu0 0.0
    %68 = vmatprep.subr.mxu0 0.0
    %69 = vmatpush1.msra.mxu0 0.0
    %70 = vmatprep.subr.mxu0 0.0
    %71 = vmatpush1.msra.mxu0 0.0
    %72 = vmatprep.subr.mxu0 0.0
    %73 = vmatpush1.msra.mxu0 0.0
    %74 = vmatprep.subr.mxu0 0.0
    %75 = vmatpush1.msra.mxu0 %v35
    %76 = vmatprep.subr.mxu0 0.0
    %77 = vmatpush1.msra.mxu0 %v34
    %78 = vmatprep.subr.mxu0 0.0
    %79 = vmatpush1.msra.mxu0 %v33
    %80 = vmatprep.subr.mxu0 0.0
    %81 = vmatpush1.msra.mxu0 %v32
    %82 = vmatprep.subr.mxu0 0.0
    %83 = vmatpush2.msra.mxu0 0.0
    %84 = vmatprep.subr.mxu0 0.0
    %85 = vmatpush2.msra.mxu0 0.0
    %86 = vmatprep.subr.mxu0 0.0
    %87 = vmatpush2.msra.mxu0 0.0
    %88 = vmatprep.subr.mxu0 0.0
    %89 = vmatpush2.msra.mxu0 0.0
    %90 = vmatprep.subr.mxu0 0.0
    %91 = vmatpush2.msra.mxu0 0.0
    %92 = vmatprep.subr.mxu0 0.0
    %93 = vmatpush2.msra.mxu0 0.0
    %94 = vmatprep.subr.mxu0 0.0
    %95 = vmatpush2.msra.mxu0 0.0
    %96 = vmatprep.subr.mxu0 0.0
    %97 = vmatpush2.msra.mxu0 0.0
    %98 = vmatprep.subr.mxu0 0.0
    %99 = vmatpush2.msra.mxu0 0.0
    %100 = vmatprep.subr.mxu0 0.0
    %101 = vmatpush2.msra.mxu0 0.0
    %102 = vmatprep.subr.mxu0 0.0
    %103 = vmatpush2.msra.mxu0 0.0
    %104 = vmatprep.subr.mxu0 0.0
    %105 = vmatpush2.msra.mxu0 0.0
    %106 = vmatprep.subr.mxu0 0.0
    %107 = vmatpush2.msra.mxu0 0.0
    %108 = vmatprep.subr.mxu0 0.0
    %109 = vmatpush2.msra.mxu0 0.0
    %110 = vmatprep.subr.mxu0 0.0
    %111 = vmatpush2.msra.mxu0 0.0
    %112 = vmatprep.subr.mxu0 0.0
    %113 = vmatpush2.msra.mxu0 0.0
    %114 = vmatprep.mubr.f32.mxu0 0.0
    %115 = vmatmul.mubr.f32.gmra.mxu0 %v45
    %v116 = vpop.f32.mrf.mxu0
    %v117 = vadd.f32 %v41, %v116
    %v118 = vpop.f32.mrf.mxu0
    %119 = vmatprep.mubr.f32.mxu0 0.0
    %120 = vmatmul.mubr.f32.gmra.mxu0 %v48
    %v121 = vpop.f32.mrf.mxu0
    %v122 = vadd.f32 %v41, %v121
    %v123 = vpop.f32.mrf.mxu0
    %124 = vdwg.mxu0
    %v125 = vmax.f32 %v117, 0.0
    %v126 = vmax.f32 %v122, 0.0
    %v127 = vld [vmem:[%s1] sm:$0xff]
    %v128 = vld [vmem:[%s1 + $0x8] sm:$0xff]
    %vm129 = vcmask 130048
    %v131 = vsel %vm129, %v127, 0
    %v134 = vsel %vm129, %v128, 0
    %136 = vmatprep.subr.mxu0 0.0
    %137 = vmatpush1.msra.mxu0 0.0
    %138 = vmatprep.subr.mxu0 0.0
    %139 = vmatpush1.msra.mxu0 0.0
    %140 = vmatprep.subr.mxu0 0.0
    %141 = vmatpush1.msra.mxu0 0.0
    %142 = vmatprep.subr.mxu0 0.0
    %143 = vmatpush1.msra.mxu0 0.0
    %144 = vmatprep.subr.mxu0 0.0
    %145 = vmatpush1.msra.mxu0 0.0
    %146 = vmatprep.subr.mxu0 0.0
    %147 = vmatpush1.msra.mxu0 0.0
    %148 = vmatprep.subr.mxu0 0.0
    %149 = vmatpush1.msra.mxu0 0.0
    %150 = vmatprep.subr.mxu0 0.0
    %151 = vmatpush1.msra.mxu0 0.0
    %152 = vmatprep.subr.mxu0 0.0
    %153 = vmatpush1.msra.mxu0 0.0
    %154 = vmatprep.subr.mxu0 0.0
    %155 = vmatpush1.msra.mxu0 0.0
    %156 = vmatprep.subr.mxu0 0.0
    %157 = vmatpush1.msra.mxu0 0.0
    %158 = vmatprep.subr.mxu0 0.0
    %159 = vmatpush1.msra.mxu0 0.0
    %160 = vmatprep.subr.mxu0 0.0
    %161 = vmatpush1.msra.mxu0 0.0
    %162 = vmatprep.subr.mxu0 0.0
    %163 = vmatpush1.msra.mxu0 0.0
    %164 = vmatprep.subr.mxu0 0.0
    %165 = vmatpush1.msra.mxu0 %v126
    %166 = vmatprep.subr.mxu0 0.0
    %167 = vmatpush1.msra.mxu0 %v125
    %168 = vmatprep.subr.mxu0 0.0
    %169 = vmatpush2.msra.mxu0 0.0
    %170 = vmatprep.subr.mxu0 0.0
    %171 = vmatpush2.msra.mxu0 0.0
    %172 = vmatprep.subr.mxu0 0.0
    %173 = vmatpush2.msra.mxu0 0.0
    %174 = vmatprep.subr.mxu0 0.0
    %175 = vmatpush2.msra.mxu0 0.0
    %176 = vmatprep.subr.mxu0 0.0
    %177 = vmatpush2.msra.mxu0 0.0
    %178 = vmatprep.subr.mxu0 0.0
    %179 = vmatpush2.msra.mxu0 0.0
    %180 = vmatprep.subr.mxu0 0.0
    %181 = vmatpush2.msra.mxu0 0.0
    %182 = vmatprep.subr.mxu0 0.0
    %183 = vmatpush2.msra.mxu0 0.0
    %184 = vmatprep.subr.mxu0 0.0
    %185 = vmatpush2.msra.mxu0 0.0
    %186 = vmatprep.subr.mxu0 0.0
    %187 = vmatpush2.msra.mxu0 0.0
    %188 = vmatprep.subr.mxu0 0.0
    %189 = vmatpush2.msra.mxu0 0.0
    %190 = vmatprep.subr.mxu0 0.0
    %191 = vmatpush2.msra.mxu0 0.0
    %192 = vmatprep.subr.mxu0 0.0
    %193 = vmatpush2.msra.mxu0 0.0
    %194 = vmatprep.subr.mxu0 0.0
    %195 = vmatpush2.msra.mxu0 0.0
    %196 = vmatprep.subr.mxu0 0.0
    %197 = vmatpush2.msra.mxu0 0.0
    %198 = vmatprep.subr.mxu0 0.0
    %199 = vmatpush2.msra.mxu0 0.0
    %200 = vmatprep.mubr.f32.mxu0 0.0
    %201 = vmatmul.mubr.f32.gmra.mxu0 %v131
    %v202 = vpop.f32.mrf.mxu0
    %v203 = vadd.f32 0.0, %v202
    %v204 = vpop.f32.mrf.mxu0
    %205 = vmatprep.mubr.f32.mxu0 0.0
    %206 = vmatmul.mubr.f32.gmra.mxu0 %v134
    %v207 = vpop.f32.mrf.mxu0
    %v208 = vadd.f32 0.0, %v207
    %v209 = vpop.f32.mrf.mxu0
    %210 = vdwg.mxu0
    %v211 = vld [vmem:[%s4] sm:$0xff]
    %v212 = vld [vmem:[%s4 + $0x8] sm:$0xff]
    %v213 = vld [vmem:[%s4 + $0x10] sm:$0xff]
    %v214 = vld [vmem:[%s4 + $0x18] sm:$0xff]
    %v215 = vld [vmem:[%s4 + $0x20] sm:$0xff]
    %v216 = vld [vmem:[%s4 + $0x28] sm:$0xff]
    %v217 = vld [vmem:[%s4 + $0x30] sm:$0xff]
    %v218 = vld [vmem:[%s4 + $0x38] sm:$0xff]
    %v219 = vld [vmem:[%s4 + $0x40] sm:$0xff]
    %v220 = vld [vmem:[%s4 + $0x48] sm:$0xff]
    %v221 = vld [vmem:[%s4 + $0x50] sm:$0xff]
    %v222 = vld [vmem:[%s4 + $0x58] sm:$0xff]
    %v223 = vld [vmem:[%s4 + $0x60] sm:$0xff]
    %v224 = vld [vmem:[%s4 + $0x68] sm:$0xff]
    %v225 = vld [vmem:[%s4 + $0x70] sm:$0xff]
    %v226 = vld [vmem:[%s4 + $0x78] sm:$0xff]
    %v228 = vsel %vm129, %v211, 0
    %v231 = vsel %vm129, %v212, 0
    %v234 = vsel %vm129, %v213, 0
    %v237 = vsel %vm129, %v214, 0
    %v240 = vsel %vm129, %v215, 0
    %v243 = vsel %vm129, %v216, 0
    %v246 = vsel %vm129, %v217, 0
    %v249 = vsel %vm129, %v218, 0
    %v252 = vsel %vm129, %v219, 0
    %v255 = vsel %vm129, %v220, 0
    %v258 = vsel %vm129, %v221, 0
    %v261 = vsel %vm129, %v222, 0
    %v264 = vsel %vm129, %v223, 0
    %v267 = vsel %vm129, %v224, 0
    %v270 = vsel %vm129, %v225, 0
    %v273 = vsel %vm129, %v226, 0
    %275 = vmatprep.subr.mxu0 0.0
    %276 = vmatpush1.msra.mxu0 0.0
    %277 = vmatprep.subr.mxu0 0.0
    %278 = vmatpush1.msra.mxu0 0.0
    %279 = vmatprep.subr.mxu0 0.0
    %280 = vmatpush1.msra.mxu0 0.0
    %281 = vmatprep.subr.mxu0 0.0
    %282 = vmatpush1.msra.mxu0 0.0
    %283 = vmatprep.subr.mxu0 0.0
    %284 = vmatpush1.msra.mxu0 0.0
    %285 = vmatprep.subr.mxu0 0.0
    %286 = vmatpush1.msra.mxu0 0.0
    %287 = vmatprep.subr.mxu0 0.0
    %288 = vmatpush1.msra.mxu0 0.0
    %289 = vmatprep.subr.mxu0 0.0
    %290 = vmatpush1.msra.mxu0 0.0
    %291 = vmatprep.subr.mxu0 0.0
    %292 = vmatpush1.msra.mxu0 0.0
    %293 = vmatprep.subr.mxu0 0.0
    %294 = vmatpush1.msra.mxu0 0.0
    %295 = vmatprep.subr.mxu0 0.0
    %296 = vmatpush1.msra.mxu0 0.0
    %297 = vmatprep.subr.mxu0 0.0
    %298 = vmatpush1.msra.mxu0 0.0
    %299 = vmatprep.subr.mxu0 0.0
    %300 = vmatpush1.msra.mxu0 0.0
    %301 = vmatprep.subr.mxu0 0.0
    %302 = vmatpush1.msra.mxu0 0.0
    %303 = vmatprep.subr.mxu0 0.0
    %304 = vmatpush1.msra.mxu0 %v208
    %305 = vmatprep.subr.mxu0 0.0
    %306 = vmatpush1.msra.mxu0 %v203
    %307 = vmatprep.subr.mxu0 0.0
    %308 = vmatpush2.msra.mxu0 0.0
    %309 = vmatprep.subr.mxu0 0.0
    %310 = vmatpush2.msra.mxu0 0.0
    %311 = vmatprep.subr.mxu0 0.0
    %312 = vmatpush2.msra.mxu0 0.0
    %313 = vmatprep.subr.mxu0 0.0
    %314 = vmatpush2.msra.mxu0 0.0
    %315 = vmatprep.subr.mxu0 0.0
    %316 = vmatpush2.msra.mxu0 0.0
    %317 = vmatprep.subr.mxu0 0.0
    %318 = vmatpush2.msra.mxu0 0.0
    %319 = vmatprep.subr.mxu0 0.0
    %320 = vmatpush2.msra.mxu0 0.0
    %321 = vmatprep.subr.mxu0 0.0
    %322 = vmatpush2.msra.mxu0 0.0
    %323 = vmatprep.subr.mxu0 0.0
    %324 = vmatpush2.msra.mxu0 0.0
    %325 = vmatprep.subr.mxu0 0.0
    %326 = vmatpush2.msra.mxu0 0.0
    %327 = vmatprep.subr.mxu0 0.0
    %328 = vmatpush2.msra.mxu0 0.0
    %329 = vmatprep.subr.mxu0 0.0
    %330 = vmatpush2.msra.mxu0 0.0
    %331 = vmatprep.subr.mxu0 0.0
    %332 = vmatpush2.msra.mxu0 0.0
    %333 = vmatprep.subr.mxu0 0.0
    %334 = vmatpush2.msra.mxu0 0.0
    %335 = vmatprep.subr.mxu0 0.0
    %336 = vmatpush2.msra.mxu0 0.0
    %337 = vmatprep.subr.mxu0 0.0
    %338 = vmatpush2.msra.mxu0 0.0
    %339 = vmatprep.mubr.f32.mxu0 0.0
    %340 = vmatmul.mubr.f32.gmra.mxu0 %v228
    %v341 = vpop.f32.mrf.mxu0
    %v342 = vadd.f32 0.0, %v341
    %v343 = vpop.f32.mrf.mxu0
    %344 = vmatprep.mubr.f32.mxu0 0.0
    %345 = vmatmul.mubr.f32.gmra.mxu0 %v231
    %v346 = vpop.f32.mrf.mxu0
    %v347 = vadd.f32 0.0, %v346
    %v348 = vpop.f32.mrf.mxu0
    %349 = vmatprep.mubr.f32.mxu0 0.0
    %350 = vmatmul.mubr.f32.gmra.mxu0 %v234
    %v351 = vpop.f32.mrf.mxu0
    %v352 = vadd.f32 0.0, %v351
    %v353 = vpop.f32.mrf.mxu0
    %354 = vmatprep.mubr.f32.mxu0 0.0
    %355 = vmatmul.mubr.f32.gmra.mxu0 %v237
    %v356 = vpop.f32.mrf.mxu0
    %v357 = vadd.f32 0.0, %v356
    %v358 = vpop.f32.mrf.mxu0
    %359 = vmatprep.mubr.f32.mxu0 0.0
    %360 = vmatmul.mubr.f32.gmra.mxu0 %v240
    %v361 = vpop.f32.mrf.mxu0
    %v362 = vadd.f32 0.0, %v361
    %v363 = vpop.f32.mrf.mxu0
    %364 = vmatprep.mubr.f32.mxu0 0.0
    %365 = vmatmul.mubr.f32.gmra.mxu0 %v243
    %v366 = vpop.f32.mrf.mxu0
    %v367 = vadd.f32 0.0, %v366
    %v368 = vpop.f32.mrf.mxu0
    %369 = vmatprep.mubr.f32.mxu0 0.0
    %370 = vmatmul.mubr.f32.gmra.mxu0 %v246
    %v371 = vpop.f32.mrf.mxu0
    %v372 = vadd.f32 0.0, %v371
    %v373 = vpop.f32.mrf.mxu0
    %374 = vmatprep.mubr.f32.mxu0 0.0
    %375 = vmatmul.mubr.f32.gmra.mxu0 %v249
    %v376 = vpop.f32.mrf.mxu0
    %v377 = vadd.f32 0.0, %v376
    %v378 = vpop.f32.mrf.mxu0
    %379 = vmatprep.mubr.f32.mxu0 0.0
    %380 = vmatmul.mubr.f32.gmra.mxu0 %v252
    %v381 = vpop.f32.mrf.mxu0
    %v382 = vadd.f32 0.0, %v381
    %v383 = vpop.f32.mrf.mxu0
    %384 = vmatprep.mubr.f32.mxu0 0.0
    %385 = vmatmul.mubr.f32.gmra.mxu0 %v255
    %v386 = vpop.f32.mrf.mxu0
    %v387 = vadd.f32 0.0, %v386
    %v388 = vpop.f32.mrf.mxu0
    %389 = vmatprep.mubr.f32.mxu0 0.0
    %390 = vmatmul.mubr.f32.gmra.mxu0 %v258
    %v391 = vpop.f32.mrf.mxu0
    %v392 = vadd.f32 0.0, %v391
    %v393 = vpop.f32.mrf.mxu0
    %394 = vmatprep.mubr.f32.mxu0 0.0
    %395 = vmatmul.mubr.f32.gmra.mxu0 %v261
    %v396 = vpop.f32.mrf.mxu0
    %v397 = vadd.f32 0.0, %v396
    %v398 = vpop.f32.mrf.mxu0
    %399 = vmatprep.mubr.f32.mxu0 0.0
    %400 = vmatmul.mubr.f32.gmra.mxu0 %v264
    %v401 = vpop.f32.mrf.mxu0
    %v402 = vadd.f32 0.0, %v401
    %v403 = vpop.f32.mrf.mxu0
    %404 = vmatprep.mubr.f32.mxu0 0.0
    %405 = vmatmul.mubr.f32.gmra.mxu0 %v267
    %v406 = vpop.f32.mrf.mxu0
    %v407 = vadd.f32 0.0, %v406
    %v408 = vpop.f32.mrf.mxu0
    %409 = vmatprep.mubr.f32.mxu0 0.0
    %410 = vmatmul.mubr.f32.gmra.mxu0 %v270
    %v411 = vpop.f32.mrf.mxu0
    %v412 = vadd.f32 0.0, %v411
    %v413 = vpop.f32.mrf.mxu0
    %414 = vmatprep.mubr.f32.mxu0 0.0
    %415 = vmatmul.mubr.f32.gmra.mxu0 %v273
    %v416 = vpop.f32.mrf.mxu0
    %v417 = vadd.f32 0.0, %v416
    %v418 = vpop.f32.mrf.mxu0
    %419 = vdwg.mxu0
    %v420 = vld [vmem:[%s5] sm:$0xff]
    %v421 = vld [vmem:[%s5 + $0x8] sm:$0xff]
    %v422 = vld [vmem:[%s6] sm:$0xff]
    %v423 = vld [vmem:[%s6 + $0x8] sm:$0xff]
    %v424 = vld [vmem:[%s6 + $0x10] sm:$0xff]
    %v425 = vld [vmem:[%s6 + $0x18] sm:$0xff]
    %v426 = vld [vmem:[%s6 + $0x20] sm:$0xff]
    %v427 = vld [vmem:[%s6 + $0x28] sm:$0xff]
    %v428 = vld [vmem:[%s6 + $0x30] sm:$0xff]
    %v429 = vld [vmem:[%s6 + $0x38] sm:$0xff]
    %v430 = vld [vmem:[%s6 + $0x40] sm:$0xff]
    %v431 = vld [vmem:[%s6 + $0x48] sm:$0xff]
    %v432 = vld [vmem:[%s6 + $0x50] sm:$0xff]
    %v433 = vld [vmem:[%s6 + $0x58] sm:$0xff]
    %v434 = vld [vmem:[%s6 + $0x60] sm:$0xff]
    %v435 = vld [vmem:[%s6 + $0x68] sm:$0xff]
    %v436 = vld [vmem:[%s6 + $0x70] sm:$0xff]
    %v437 = vld [vmem:[%s6 + $0x78] sm:$0xff]
    %v439 = vsel %vm129, %v342, 0
    %v442 = vsel %vm129, %v347, 0
    %v445 = vsel %vm129, %v352, 0
    %v448 = vsel %vm129, %v357, 0
    %v451 = vsel %vm129, %v362, 0
    %v454 = vsel %vm129, %v367, 0
    %v457 = vsel %vm129, %v372, 0
    %v460 = vsel %vm129, %v377, 0
    %v463 = vsel %vm129, %v382, 0
    %v466 = vsel %vm129, %v387, 0
    %v469 = vsel %vm129, %v392, 0
    %v472 = vsel %vm129, %v397, 0
    %v475 = vsel %vm129, %v402, 0
    %v478 = vsel %vm129, %v407, 0
    %v481 = vsel %vm129, %v412, 0
    %v484 = vsel %vm129, %v417, 0
    %486 = vmatprep.subr.mxu0 0.0
    %487 = vmatpush1.msra.mxu0 0.0
    %488 = vmatprep.subr.mxu0 0.0
    %489 = vmatpush1.msra.mxu0 0.0
    %490 = vmatprep.subr.mxu0 0.0
    %491 = vmatpush1.msra.mxu0 0.0
    %492 = vmatprep.subr.mxu0 0.0
    %493 = vmatpush1.msra.mxu0 0.0
    %494 = vmatprep.subr.mxu0 0.0
    %495 = vmatpush1.msra.mxu0 0.0
    %496 = vmatprep.subr.mxu0 0.0
    %497 = vmatpush1.msra.mxu0 0.0
    %498 = vmatprep.subr.mxu0 0.0
    %499 = vmatpush1.msra.mxu0 0.0
    %500 = vmatprep.subr.mxu0 0.0
    %501 = vmatpush1.msra.mxu0 0.0
    %502 = vmatprep.subr.mxu0 0.0
    %503 = vmatpush1.msra.mxu0 0.0
    %504 = vmatprep.subr.mxu0 0.0
    %505 = vmatpush1.msra.mxu0 0.0
    %506 = vmatprep.subr.mxu0 0.0
    %507 = vmatpush1.msra.mxu0 0.0
    %508 = vmatprep.subr.mxu0 0.0
    %509 = vmatpush1.msra.mxu0 0.0
    %510 = vmatprep.subr.mxu0 0.0
    %511 = vmatpush1.msra.mxu0 0.0
    %512 = vmatprep.subr.mxu0 0.0
    %513 = vmatpush1.msra.mxu0 0.0
    %514 = vmatprep.subr.mxu0 0.0
    %515 = vmatpush1.msra.mxu0 %v421
    %516 = vmatprep.subr.mxu0 0.0
    %517 = vmatpush1.msra.mxu0 %v420
    %518 = vmatprep.subr.mxu0 0.0
    %519 = vmatpush2.msra.mxu0 0.0
    %520 = vmatprep.subr.mxu0 0.0
    %521 = vmatpush2.msra.mxu0 0.0
    %522 = vmatprep.subr.mxu0 0.0
    %523 = vmatpush2.msra.mxu0 0.0
    %524 = vmatprep.subr.mxu0 0.0
    %525 = vmatpush2.msra.mxu0 0.0
    %526 = vmatprep.subr.mxu0 0.0
    %527 = vmatpush2.msra.mxu0 0.0
    %528 = vmatprep.subr.mxu0 0.0
    %529 = vmatpush2.msra.mxu0 0.0
    %530 = vmatprep.subr.mxu0 0.0
    %531 = vmatpush2.msra.mxu0 0.0
    %532 = vmatprep.subr.mxu0 0.0
    %533 = vmatpush2.msra.mxu0 0.0
    %534 = vmatprep.subr.mxu0 0.0
    %535 = vmatpush2.msra.mxu0 0.0
    %536 = vmatprep.subr.mxu0 0.0
    %537 = vmatpush2.msra.mxu0 0.0
    %538 = vmatprep.subr.mxu0 0.0
    %539 = vmatpush2.msra.mxu0 0.0
    %540 = vmatprep.subr.mxu0 0.0
    %541 = vmatpush2.msra.mxu0 0.0
    %542 = vmatprep.subr.mxu0 0.0
    %543 = vmatpush2.msra.mxu0 0.0
    %544 = vmatprep.subr.mxu0 0.0
    %545 = vmatpush2.msra.mxu0 0.0
    %546 = vmatprep.subr.mxu0 0.0
    %547 = vmatpush2.msra.mxu0 0.0
    %548 = vmatprep.subr.mxu0 0.0
    %549 = vmatpush2.msra.mxu0 0.0
    %550 = vmatprep.mubr.f32.mxu0 0.0
    %551 = vmatmul.mubr.f32.gmra.mxu0 %v439
    %v552 = vpop.f32.mrf.mxu0
    %v553 = vadd.f32 %v422, %v552
    %v554 = vpop.f32.mrf.mxu0
    %555 = vmatprep.mubr.f32.mxu0 0.0
    %556 = vmatmul.mubr.f32.gmra.mxu0 %v442
    %v557 = vpop.f32.mrf.mxu0
    %v558 = vadd.f32 %v423, %v557
    %v559 = vpop.f32.mrf.mxu0
    %560 = vmatprep.mubr.f32.mxu0 0.0
    %561 = vmatmul.mubr.f32.gmra.mxu0 %v445
    %v562 = vpop.f32.mrf.mxu0
    %v563 = vadd.f32 %v424, %v562
    %v564 = vpop.f32.mrf.mxu0
    %565 = vmatprep.mubr.f32.mxu0 0.0
    %566 = vmatmul.mubr.f32.gmra.mxu0 %v448
    %v567 = vpop.f32.mrf.mxu0
    %v568 = vadd.f32 %v425, %v567
    %v569 = vpop.f32.mrf.mxu0
    %570 = vmatprep.mubr.f32.mxu0 0.0
    %571 = vmatmul.mubr.f32.gmra.mxu0 %v451
    %v572 = vpop.f32.mrf.mxu0
    %v573 = vadd.f32 %v426, %v572
    %v574 = vpop.f32.mrf.mxu0
    %575 = vmatprep.mubr.f32.mxu0 0.0
    %576 = vmatmul.mubr.f32.gmra.mxu0 %v454
    %v577 = vpop.f32.mrf.mxu0
    %v578 = vadd.f32 %v427, %v577
    %v579 = vpop.f32.mrf.mxu0
    %580 = vmatprep.mubr.f32.mxu0 0.0
    %581 = vmatmul.mubr.f32.gmra.mxu0 %v457
    %v582 = vpop.f32.mrf.mxu0
    %v583 = vadd.f32 %v428, %v582
    %v584 = vpop.f32.mrf.mxu0
    %585 = vmatprep.mubr.f32.mxu0 0.0
    %586 = vmatmul.mubr.f32.gmra.mxu0 %v460
    %v587 = vpop.f32.mrf.mxu0
    %v588 = vadd.f32 %v429, %v587
    %v589 = vpop.f32.mrf.mxu0
    %590 = vmatprep.mubr.f32.mxu0 0.0
    %591 = vmatmul.mubr.f32.gmra.mxu0 %v463
    %v592 = vpop.f32.mrf.mxu0
    %v593 = vadd.f32 %v430, %v592
    %v594 = vpop.f32.mrf.mxu0
    %595 = vmatprep.mubr.f32.mxu0 0.0
    %596 = vmatmul.mubr.f32.gmra.mxu0 %v466
    %v597 = vpop.f32.mrf.mxu0
    %v598 = vadd.f32 %v431, %v597
    %v599 = vpop.f32.mrf.mxu0
    %600 = vmatprep.mubr.f32.mxu0 0.0
    %601 = vmatmul.mubr.f32.gmra.mxu0 %v469
    %v602 = vpop.f32.mrf.mxu0
    %v603 = vadd.f32 %v432, %v602
    %v604 = vpop.f32.mrf.mxu0
    %605 = vmatprep.mubr.f32.mxu0 0.0
    %606 = vmatmul.mubr.f32.gmra.mxu0 %v472
    %v607 = vpop.f32.mrf.mxu0
    %v608 = vadd.f32 %v433, %v607
    %v609 = vpop.f32.mrf.mxu0
    %610 = vmatprep.mubr.f32.mxu0 0.0
    %611 = vmatmul.mubr.f32.gmra.mxu0 %v475
    %v612 = vpop.f32.mrf.mxu0
    %v613 = vadd.f32 %v434, %v612
    %v614 = vpop.f32.mrf.mxu0
    %615 = vmatprep.mubr.f32.mxu0 0.0
    %616 = vmatmul.mubr.f32.gmra.mxu0 %v478
    %v617 = vpop.f32.mrf.mxu0
    %v618 = vadd.f32 %v435, %v617
    %v619 = vpop.f32.mrf.mxu0
    %620 = vmatprep.mubr.f32.mxu0 0.0
    %621 = vmatmul.mubr.f32.gmra.mxu0 %v481
    %v622 = vpop.f32.mrf.mxu0
    %v623 = vadd.f32 %v436, %v622
    %v624 = vpop.f32.mrf.mxu0
    %625 = vmatprep.mubr.f32.mxu0 0.0
    %626 = vmatmul.mubr.f32.gmra.mxu0 %v484
    %v627 = vpop.f32.mrf.mxu0
    %v628 = vadd.f32 %v437, %v627
    %v629 = vpop.f32.mrf.mxu0
    %630 = vdwg.mxu0
    %631 = vmatprep.subr.mxu0 0.0
    %632 = vmatpush1.xpose.msra.mxu0 %v628
    %633 = vmatprep.subr.mxu0 0.0
    %634 = vmatpush1.xpose.msra.mxu0 %v623
    %635 = vmatprep.subr.mxu0 0.0
    %636 = vmatpush1.xpose.msra.mxu0 %v618
    %637 = vmatprep.subr.mxu0 0.0
    %638 = vmatpush1.xpose.msra.mxu0 %v613
    %639 = vmatprep.subr.mxu0 0.0
    %640 = vmatpush1.xpose.msra.mxu0 %v608
    %641 = vmatprep.subr.mxu0 0.0
    %642 = vmatpush1.xpose.msra.mxu0 %v603
    %643 = vmatprep.subr.mxu0 0.0
    %644 = vmatpush1.xpose.msra.mxu0 %v598
    %645 = vmatprep.subr.mxu0 0.0
    %646 = vmatpush1.xpose.msra.mxu0 %v593
    %647 = vmatprep.subr.mxu0 0.0
    %648 = vmatpush1.xpose.msra.mxu0 %v588
    %649 = vmatprep.subr.mxu0 0.0
    %650 = vmatpush1.xpose.msra.mxu0 %v583
    %651 = vmatprep.subr.mxu0 0.0
    %652 = vmatpush1.xpose.msra.mxu0 %v578
    %653 = vmatprep.subr.mxu0 0.0
    %654 = vmatpush1.xpose.msra.mxu0 %v573
    %655 = vmatprep.subr.mxu0 0.0
    %656 = vmatpush1.xpose.msra.mxu0 %v568
    %657 = vmatprep.subr.mxu0 0.0
    %658 = vmatpush1.xpose.msra.mxu0 %v563
    %659 = vmatprep.subr.mxu0 0.0
    %660 = vmatpush1.xpose.msra.mxu0 %v558
    %661 = vmatprep.subr.mxu0 0.0
    %662 = vmatpush1.xpose.msra.mxu0 %v553
    %663 = vmatprep.subr.mxu0 0.0
    %664 = vmatpush2.xpose.msra.mxu0 0.0
    %665 = vmatprep.subr.mxu0 0.0
    %666 = vmatpush2.xpose.msra.mxu0 0.0
    %667 = vmatprep.subr.mxu0 0.0
    %668 = vmatpush2.xpose.msra.mxu0 0.0
    %669 = vmatprep.subr.mxu0 0.0
    %670 = vmatpush2.xpose.msra.mxu0 0.0
    %671 = vmatprep.subr.mxu0 0.0
    %672 = vmatpush2.xpose.msra.mxu0 0.0
    %673 = vmatprep.subr.mxu0 0.0
    %674 = vmatpush2.xpose.msra.mxu0 0.0
    %675 = vmatprep.subr.mxu0 0.0
    %676 = vmatpush2.xpose.msra.mxu0 0.0
    %677 = vmatprep.subr.mxu0 0.0
    %678 = vmatpush2.xpose.msra.mxu0 0.0
    %679 = vmatprep.subr.mxu0 0.0
    %680 = vmatpush2.xpose.msra.mxu0 0.0
    %681 = vmatprep.subr.mxu0 0.0
    %682 = vmatpush2.xpose.msra.mxu0 0.0
    %683 = vmatprep.subr.mxu0 0.0
    %684 = vmatpush2.xpose.msra.mxu0 0.0
    %685 = vmatprep.subr.mxu0 0.0
    %686 = vmatpush2.xpose.msra.mxu0 0.0
    %687 = vmatprep.subr.mxu0 0.0
    %688 = vmatpush2.xpose.msra.mxu0 0.0
    %689 = vmatprep.subr.mxu0 0.0
    %690 = vmatpush2.xpose.msra.mxu0 0.0
    %691 = vmatprep.subr.mxu0 0.0
    %692 = vmatpush2.xpose.msra.mxu0 0.0
    %693 = vmatprep.subr.mxu0 0.0
    %694 = vmatpush2.xpose.msra.mxu0 0.0
    %695 = vmatprep.mubr.f32.mxu0 0.0
    %696 = vmatmul.mubr.f32.gmra.mxu0 %v553
    %v697 = vpop.f32.mrf.mxu0
    %v698 = vadd.f32 0.0, %v697
    %v699 = vpop.f32.mrf.mxu0
    %700 = vdwg.mxu0
    %v701 = vxor.u32 %v698, 2147483648
    %v702 = vmul.f32 %v701, 1.442695
    %v703 = vpow.pop %v702
    %v704 = vadd.f32 %v703, 1.0
    %v705 = vrcp.pop %v704
    %v706 = vmul.f32 1.0, %v705
    %vm707 = vcmp.ne.f32.partialorder %v706, %v706
    %v708 = vsel %vm707, 0.5, %v706
    %v709 = vmax.f32 %v553, -1.0
    %v710 = vmin.f32 %v709, 1.0
    %711 = vst [vmem:[#allocation2] sm:$0xff] %v710
    %712 = vst [vmem:[#allocation4] sm:$0xff] %v708
    // Predicated region
    $region30: #{graph_decoder_batched.1} parent=1 // pred_check
      _
    $region31: #{graph_decoder_batched.1} parent=1 // pred_check_branch
      %714 = sbr.rel (0) target = $region33
    $region32: #{graph_decoder_batched.1} parent=1 // pred_region
      %s716 = ssub.s32 128, 128
      %717 = vsyncadd [#allocation3], %s716
      %s719 = sshll.u32 [#allocation2], 4
      %s720 = int_to_ptr.vmem [resolvable:$true] %s719
      %722 = dma.vmem_to_hbm [thread:$0]  %s720, 128, %s7, [#allocation3]
    $region33: #{graph_decoder_batched.1} parent=1 // pred_fallthru
      _
    // Predicated region
    $region34: #{graph_decoder_batched.1} parent=1 // pred_check
      _
    $region35: #{graph_decoder_batched.1} parent=1 // pred_check_branch
      %724 = sbr.rel (0) target = $region37
    $region36: #{graph_decoder_batched.1} parent=1 // pred_region
      %s726 = ssub.s32 128, 128
      %727 = vsyncadd [#allocation5], %s726
      %s729 = sshll.u32 [#allocation4], 4
      %s730 = int_to_ptr.vmem [resolvable:$true] %s729
      %732 = dma.vmem_to_hbm [thread:$0]  %s730, 128, %s8, [#allocation5]
    $region37: #{graph_decoder_batched.1} parent=1 // pred_fallthru
      _
    // Predicated region
    $region38: #{graph_decoder_batched.1} parent=1 // pred_check
      _
    $region39: #{graph_decoder_batched.1} parent=1 // pred_check_branch
      %734 = sbr.rel (0) target = $region41
    $region40: #{graph_decoder_batched.1} parent=1 // pred_region
      %735 = dma.done [#allocation3], 128
    $region41: #{graph_decoder_batched.1} parent=1 // pred_fallthru
      _
    // Predicated region
    $region42: #{graph_decoder_batched.1} parent=1 // pred_check
      _
    $region43: #{graph_decoder_batched.1} parent=1 // pred_check_branch
      %737 = sbr.rel (0) target = $region45
    $region44: #{graph_decoder_batched.1} parent=1 // pred_region
      %738 = dma.done [#allocation5], 128
    $region45: #{graph_decoder_batched.1} parent=1 // pred_fallthru
      _
    %739 = vsyncpa [#allocation3], 1
    %740 = vsyncpa [#allocation5], 1

</llo_original>
